<compile_context>
chip_gen: v7x
topology: tpu7x:2x2x1
jax: 0.10.0
libtpu: 0.0.40
codegen_flags: <defaults>
</compile_context>

<pallas_src>
import functools
import math

import jax
import jax.numpy as jnp
from jax.experimental import pallas as pl
from jax.experimental.pallas import tpu as pltpu

_BLOCK_BYTES_BUDGET = 2 * 1024 * 1024   # per block; x4 live buffers ~ 8 MiB total
_VMEM_LIMIT_BYTES = 32 * 1024 * 1024    # safe on v5e/v6e (128 MiB) and v7x (64 MiB)
_MAX_COL_BLOCK = 2048                   # lane-dense; ~85%+ HBM roofline for copies


def _sublane_multiple(dtype) -> int:
    # Sub-32-bit dtypes pack along sublanes: 8 (4B) / 16 (2B) / 32 (1B).
    return {4: 8, 2: 16, 1: 32}.get(jnp.dtype(dtype).itemsize, 8)


def _largest_aligned_divisor(n: int, base: int, cap: int) -> int:
    """Largest d <= cap with d % base == 0 and n % d == 0 (requires n % base == 0)."""
    best = base
    d = base
    limit = min(n, cap)
    while d <= limit:
        if n % d == 0:
            best = d
        d += base
    return best


def _largest_divisor_leq(n: int, cap: int) -> int:
    """Largest divisor of n that is <= cap."""
    cap = max(1, min(n, cap))
    best = 1
    i = 1
    while i * i <= n:
        if n % i == 0:
            for d in (i, n // i):
                if d <= cap and d > best:
                    best = d
        i += 1
    return best


def _copy_kernel(x_ref, o_ref):
    # x_ref already points at the correct sub-rectangle (via the index_map);
    # stream the tile through VMEM to the output.
    o_ref[...] = x_ref[...]


def _slice_mid_kernel(x_ref, o_ref, *, start, length):
    # Fallback path: full-C block in, statically sliced channel range out.
    o_ref[...] = x_ref[:, start:start + length, :]


def _copy_2d(x2, row_start, rows, col_start, cols):
    """Copy x2[row_start:row_start+rows, col_start:col_start+cols] with a tiled,
    lane-dense, double-axis-blocked Pallas kernel.

    Callers guarantee: the column range is either the full width or 128-aligned
    (start and size), and the row range is either the full height or aligned to
    the dtype's sublane multiple."""
    n_rows_total, n_cols_total = x2.shape
    itemsize = jnp.dtype(x2.dtype).itemsize
    sub = _sublane_multiple(x2.dtype)

    # ---- column blocking: biggest lane-dense (multiple-of-128) block. ----
    if col_start == 0 and cols == n_cols_total and cols % 128 != 0:
        col_block = cols                       # full-width block (always legal)
    else:
        col_align = math.gcd(col_start, cols)  # gcd(0, cols) == cols
        assert col_align % 128 == 0
        col_block = _largest_aligned_divisor(col_align, 128,
                                             min(_MAX_COL_BLOCK, col_align))

    # ---- row blocking: dtype-aware sublane multiple, sized to the VMEM budget. ----
    row_budget = max(sub, _BLOCK_BYTES_BUDGET // (col_block * itemsize))
    if row_start == 0 and rows == n_rows_total and rows % sub != 0:
        # TODO(synk): huge, non-sublane-aligned `outer` keeps a full-height block.
        row_block = rows                       # full-height block (always legal)
    else:
        row_align = math.gcd(row_start, rows)
        assert row_align % sub == 0
        row_block = _largest_aligned_divisor(row_align, sub,
                                             max(sub, min(row_align, row_budget)))

    grid = (rows // row_block, cols // col_block)
    row_off = row_start // row_block
    col_off = col_start // col_block

    return pl.pallas_call(
        _copy_kernel,
        out_shape=jax.ShapeDtypeStruct((rows, cols), x2.dtype),
        grid_spec=pltpu.PrefetchScalarGridSpec(
            num_scalar_prefetch=0,
            grid=grid,
            in_specs=[pl.BlockSpec((row_block, col_block),
                                   lambda i, j: (row_off + i, col_off + j))],
            out_specs=pl.BlockSpec((row_block, col_block),
                                   lambda i, j: (i, j)),
        ),
        compiler_params=pltpu.CompilerParams(
            dimension_semantics=("parallel", "parallel"),
            vmem_limit_bytes=_VMEM_LIMIT_BYTES),
    )(x2)


def split_half(x, dim: int, index: int):
    """Pallas equivalent of _SplitHalf(dim, index).forward(x)."""
    assert index in (0, 1)
    dim = dim % x.ndim
    shape = x.shape
    C = shape[dim]
    c = C // 2
    start, length = (0, c) if index == 0 else (c, C - c)

    out_shape = shape[:dim] + (length,) + shape[dim + 1:]
    if any(s == 0 for s in out_shape):
        return jnp.zeros(out_shape, x.dtype)

    outer = 1
    for s in shape[:dim]:
        outer *= s
    inner = 1
    for s in shape[dim + 1:]:
        inner *= s

    start_col = start * inner
    half_cols = length * inner
    sub = _sublane_multiple(x.dtype)

    # --- Path B: split along dim 0 (outer == 1).  The half is fully contiguous:
    # reshape it into a sublane/lane-dense 2D slab (rows x W) so the copy uses
    # full vregs instead of a single (1, N) row. ---
    if outer == 1:
        total = C * inner
        g = math.gcd(math.gcd(start_col, half_cols), total)
        W = 0
        w = 128
        while w <= min(g, 1024):
            if (g % w == 0 and start_col % (w * sub) == 0
                    and half_cols % (w * sub) == 0):
                W = w
            w += 128
        if W:
            x2 = x.reshape(total // W, W)
            out2 = _copy_2d(x2, start_col // W, half_cols // W, 0, W)
            return out2.reshape(out_shape)

    # --- Path A: lane-aligned column-range copy on the 2D slab (outer, C*inner). ---
    col_align = math.gcd(start_col, half_cols)
    if col_align % 128 == 0:
        x2 = x.reshape(outer, C * inner)
        out2 = _copy_2d(x2, 0, outer, start_col, half_cols)
        return out2.reshape(out_shape)

    # --- Path C: non-128-aligned halves.  Keep the slab 3D so the last two block
    # dims equal the full array dims (always satisfies the (8,128) rule) and
    # slice the channel range inside the kernel.
    # TODO(synk): this reads both halves (2x HBM read) per tile; a strided
    # HBM->HBM DMA via memory_space=pl.ANY would avoid that for odd widths. ---
    x3 = x.reshape(outer, C, inner)
    itemsize = jnp.dtype(x.dtype).itemsize
    row_budget = max(1, _BLOCK_BYTES_BUDGET // max(1, C * inner * itemsize))
    row_block = _largest_divisor_leq(outer, row_budget)
    out3 = pl.pallas_call(
        functools.partial(_slice_mid_kernel, start=start, length=length),
        out_shape=jax.ShapeDtypeStruct((outer, length, inner), x.dtype),
        grid_spec=pltpu.PrefetchScalarGridSpec(
            num_scalar_prefetch=0,
            grid=(outer // row_block,),
            in_specs=[pl.BlockSpec((row_block, C, inner), lambda i: (i, 0, 0))],
            out_specs=pl.BlockSpec((row_block, length, inner), lambda i: (i, 0, 0)),
        ),
        compiler_params=pltpu.CompilerParams(
            dimension_semantics=("parallel",),
            vmem_limit_bytes=_VMEM_LIMIT_BYTES),
    )(x3)
    return out3.reshape(out_shape)


if __name__ == "__main__":
    key = jax.random.PRNGKey(0)
    # NCHW input consistent with the module's typical use on conv features.
    x = jax.random.normal(key, (2, 4, 16, 16), dtype=jnp.float32)

    # _SplitHalf(dim=1, index=0): first half of channels (torch does .clone()).
    y0 = split_half(x, dim=1, index=0)
    jax.block_until_ready(y0)
    # _SplitHalf(dim=1, index=1): second half of channels.
    y1 = split_half(x, dim=1, index=1)
    jax.block_until_ready(y1)
    # _SplitHalf(dim=2, index=1): second half along H.
    y2 = split_half(x, dim=2, index=1)
    jax.block_until_ready(y2)

    assert y0.shape == (2, 2, 16, 16) and jnp.array_equal(y0, x[:, :2])
    assert y1.shape == (2, 2, 16, 16) and jnp.array_equal(y1, x[:, 2:])
    assert y2.shape == (2, 4, 8, 16) and jnp.array_equal(y2, x[:, :, 8:, :])

    # bf16 input exercises dtype-aware sublane blocking.
    xb = x.astype(jnp.bfloat16)
    yb = split_half(xb, dim=1, index=1)
    jax.block_until_ready(yb)
    assert jnp.array_equal(yb, xb[:, 2:])

    # Odd channel count + non-128-aligned inner exercises the 3D fallback path
    # (and torch's exact odd-C semantics: index 1 keeps the extra channel).
    xo = jax.random.normal(jax.random.PRNGKey(1), (2, 5, 4, 10), dtype=jnp.float32)
    z0 = split_half(xo, dim=1, index=0)
    z1 = split_half(xo, dim=1, index=1)
    jax.block_until_ready(z1)
    assert z0.shape == (2, 2, 4, 10) and jnp.array_equal(z0, xo[:, :2])
    assert z1.shape == (2, 3, 4, 10) and jnp.array_equal(z1, xo[:, 2:])

    # Split along dim 0 exercises the dense-reshape path (Path B).
    xr = jax.random.normal(jax.random.PRNGKey(2), (16, 8, 32), dtype=jnp.float32)
    w1 = split_half(xr, dim=0, index=1)
    jax.block_until_ready(w1)
    assert w1.shape == (8, 8, 32) and jnp.array_equal(w1, xr[8:])

    print("KERNEL_OK")
</pallas_src>

<mosaic_0001>
module attributes {stable_mosaic.version = 11 : i64} {
  func.func @_copy_kernel(%arg0: i32, %arg1: i32, %arg2: memref<2x512xf32, #tpu.memory_space<vmem>>, %arg3: memref<2x512xf32, #tpu.memory_space<vmem>>) attributes {dimension_semantics = [#tpu.dimension_semantics<parallel>, #tpu.dimension_semantics<parallel>], iteration_bounds = array<i64: 1, 1>, scalar_prefetch = 0 : i64, scratch_operands = 0 : i64, tpu.core_type = #tpu.core_type<tc>, window_params = [{transform_indices = @transform_0, window_bounds = array<i64: 2, 512>}, {transform_indices = @transform_1, window_bounds = array<i64: 2, 512>}]} {
    %c0 = arith.constant 0 : index
    %c0_0 = arith.constant 0 : index
    %0 = vector.load %arg2[%c0, %c0_0] : memref<2x512xf32, #tpu.memory_space<vmem>>, vector<2x512xf32>
    %c0_1 = arith.constant 0 : index
    %c0_2 = arith.constant 0 : index
    %1 = vector.load %arg3[%c0_1, %c0_2] : memref<2x512xf32, #tpu.memory_space<vmem>>, vector<2x512xf32>
    tpu.vector_store %arg3[%c0_1, %c0_2], %0 {strides = array<i32>} : memref<2x512xf32, #tpu.memory_space<vmem>>, vector<2x512xf32>,
    return
  }
  func.func @transform_0(%arg0: i32, %arg1: i32) -> (i32, i32) {
    %c0_i32 = arith.constant 0 : i32
    %0 = arith.addi %c0_i32, %arg0 : i32
    %c0_i32_0 = arith.constant 0 : i32
    %1 = arith.addi %c0_i32_0, %arg1 : i32
    %c0_i32_1 = arith.constant 0 : i32
    return %0, %1 : i32, i32
  }
  func.func @transform_1(%arg0: i32, %arg1: i32) -> (i32, i32) {
    %c0_i32 = arith.constant 0 : i32
    return %arg0, %arg1 : i32, i32
  }
}

</mosaic_0001>

<llo_original>
// kernel: tpu_custom_call.1
$region0: #{tpu_custom_call.1}
  #allocation0 [shape = 'u32[]', space=smem, size = 0x4, offset = 0x4, fixed_abs, tag = 'smem constant byte address 0x4 - core index']
  #allocation1 [shape = 'u32[144,128]{1,0:T(1,128)}', space=vmem, size = 0x12000, scoped, tag = 'internal scratch']
  %s0 = inlined_call_operand.hbm [shape: f32[2,1024], index: 0, kind: input, shape index: {}]
  %s1 = inlined_call_operand.hbm [shape: f32[2,512], index: 1, kind: output, shape index: {}]
  %s2 = sld [smem:[#allocation0]]
  $region18: #{tpu_custom_call.1} parent=0
    _
  %s4 = ssub.s32 1, %s2
  %s5 = scalar_select 0, %s4, %s2
  $region1: #{tpu_custom_call.1} parent=0
    #allocation2 [shape = 'u8[4096]{0}', space=vmem, size = 0x1000, scoped, tag = 'input window, operand 0, single buffered']
    #allocation3 [shape = 's32[1]{0}', space=sflag, size = 0x4, scoped, tag = 'scoped memory for tpu_custom_call.1']
    #allocation4 [shape = 's32[1]{0}', space=sflag, size = 0x4, scoped, tag = 'scoped memory for tpu_custom_call.1']
    #allocation5 [shape = 'u8[4096]{0}', space=vmem, size = 0x1000, scoped, tag = 'output window, operand 0, single buffered']
    %6 = vsyncpa [#allocation3], 0
    %7 = vsyncpa [#allocation4], 0
    // Predicated region
    $region2: #{tpu_custom_call.1} parent=1 // pred_check
      _
    $region3: #{tpu_custom_call.1} parent=1 // pred_check_branch
      %9 = sbr.rel (0) target = $region5
    $region4: #{tpu_custom_call.1} parent=1 // pred_region
      %s11 = ssub.s32 128, 128
      %12 = vsyncadd [#allocation3], %s11
      %s14 = sshll.u32 [#allocation2], 4
      %s15 = int_to_ptr.vmem [resolvable:$true] %s14
      %17 = dma.hbm_to_vmem [thread:$0]  %s0, 128, %s15, [#allocation3]
    $region5: #{tpu_custom_call.1} parent=1 // pred_fallthru
      _
    // Predicated region
    $region6: #{tpu_custom_call.1} parent=1 // pred_check
      _
    $region7: #{tpu_custom_call.1} parent=1 // pred_check_branch
      %19 = sbr.rel (0) target = $region9
    $region8: #{tpu_custom_call.1} parent=1 // pred_region
      %20 = dma.done [#allocation3], 128
    $region9: #{tpu_custom_call.1} parent=1 // pred_fallthru
      _
    %v21 = vld [vmem:[#allocation2] sm:$0xff]
    %22 = vst [vmem:[#allocation5] sm:$0xff] %v21
    // Predicated region
    $region10: #{tpu_custom_call.1} parent=1 // pred_check
      _
    $region11: #{tpu_custom_call.1} parent=1 // pred_check_branch
      %24 = sbr.rel (0) target = $region13
    $region12: #{tpu_custom_call.1} parent=1 // pred_region
      %s26 = ssub.s32 128, 128
      %27 = vsyncadd [#allocation4], %s26
      %s29 = sshll.u32 [#allocation5], 4
      %s30 = int_to_ptr.vmem [resolvable:$true] %s29
      %32 = dma.vmem_to_hbm [thread:$0]  %s30, 128, %s1, [#allocation4]
    $region13: #{tpu_custom_call.1} parent=1 // pred_fallthru
      _
    // Predicated region
    $region14: #{tpu_custom_call.1} parent=1 // pred_check
      _
    $region15: #{tpu_custom_call.1} parent=1 // pred_check_branch
      %34 = sbr.rel (0) target = $region17
    $region16: #{tpu_custom_call.1} parent=1 // pred_region
      %35 = dma.done [#allocation4], 128
    $region17: #{tpu_custom_call.1} parent=1 // pred_fallthru
      _
    %36 = vsyncpa [#allocation3], 1
    %37 = vsyncpa [#allocation4], 1

</llo_original>
